<compile_context>
chip_gen: v5e
topology: v5e:2x2
jax: 0.10.0
libtpu: 0.0.40
codegen_flags: <defaults>
</compile_context>

<pallas_src>
import functools

import jax
import jax.numpy as jnp
from jax.experimental import pallas as pl
from jax.experimental.pallas import tpu as pltpu


def head_kernel(cls_ref, pw_ref, pb_ref, cw_ref, cb_ref, pred_ref):
    # cls_ref: (TB, H) batch tile of CLS activations, compute dtype (bf16).
    # pw_ref:  (H, H)      pooler weight, (in, out) layout  -> canonical matmul.
    # cw_ref:  (H, n_pad)  classifier weight, (in, out) layout, zero-padded cols.
    cls = cls_ref[...]

    # pooler: cls @ Wp + bp  (f32 accumulation on the MXU, f32 tanh on the EUP)
    pooled_f32 = jnp.dot(cls, pw_ref[...],
                         preferred_element_type=jnp.float32) + pb_ref[...]
    pooled = jnp.tanh(pooled_f32).astype(cw_ref.dtype)

    # classifier: pooled @ Wc + bc, lane-dense (n_pad multiple of 128) store.
    pred = jnp.dot(pooled, cw_ref[...],
                   preferred_element_type=jnp.float32) + cb_ref[...]
    pred_ref[...] = pred.astype(pred_ref.dtype)


def _pick_batch_tile(B, max_tb=128):
    """Fixed batch tile: multiple of 8, <= max_tb, ragged last tile allowed."""
    if B <= 8:
        return B                      # tiny batch: one block == full array dim (layout-legal)
    tb = min(max_tb, max(8, (B // 8) * 8))
    # v7x has 2 TensorCores: make sure the "parallel" grid has >= 2 steps.
    if B >= 16 and pl.cdiv(B, tb) < 2:
        tb = max(8, ((B // 2) // 8) * 8)
    return tb


def _vmem_limit_bytes(TB, H, n_pad, w_itemsize):
    weights = (H * H + H * n_pad) * w_itemsize     # Buffered(1) resident weights
    biases = (H + n_pad) * 4
    cls_io = 2 * TB * H * w_itemsize               # double-buffered CLS tiles
    out_io = 2 * TB * n_pad * 4                    # double-buffered pred tiles
    interm = 2 * TB * (H + n_pad) * 4              # f32 intermediates headroom
    est = weights + biases + cls_io + out_io + interm
    # 2x margin, clamped to stay inside even v7x's 64 MiB physical VMEM.
    return int(min(56 * 1024 * 1024, max(16 * 1024 * 1024, 2 * est)))


def prepare_head_params(pooler_w, pooler_b, clf_w, clf_b,
                        compute_dtype=jnp.bfloat16):
    """One-time weight prep: transpose to (in, out), pad classifier out-dim to a
    128 multiple, cast weights to the compute dtype, biases to f32."""
    H = pooler_w.shape[1]
    num_label = clf_w.shape[0]
    n_pad = max(128, ((num_label + 127) // 128) * 128)

    pw_t = jnp.asarray(pooler_w, compute_dtype).T                       # (H, H) in->out
    cw_t = jnp.pad(jnp.asarray(clf_w, compute_dtype),
                   ((0, n_pad - num_label), (0, 0))).T                  # (H, n_pad)
    pb = jnp.asarray(pooler_b, jnp.float32).reshape(1, H)
    cb = jnp.pad(jnp.asarray(clf_b, jnp.float32),
                 (0, n_pad - num_label)).reshape(1, n_pad)
    return {"pw": pw_t, "pb": pb, "cw": cw_t, "cb": cb,
            "num_label": num_label, "n_pad": n_pad,
            "compute_dtype": compute_dtype}


def custom_model_head(last_hidden, params):
    """last_hidden: (B, S, H). params: output of prepare_head_params.
    Returns (cls, pred) exactly like CustomModel.forward (post-backbone)."""
    B, S, H = last_hidden.shape
    num_label = params["num_label"]
    n_pad = params["n_pad"]
    compute_dtype = params["compute_dtype"]

    # CLS slice stays a plain XLA op; returned in the original dtype.
    cls = last_hidden[:, 0, :]
    cls_in = cls.astype(compute_dtype)

    TB = _pick_batch_tile(B)
    grid = (pl.cdiv(B, TB),)
    w_itemsize = jnp.dtype(compute_dtype).itemsize

    resident = pl.Buffered(1)   # constant operands: no double-buffering
    pred_padded = pl.pallas_call(
        head_kernel,
        out_shape=jax.ShapeDtypeStruct((B, n_pad), jnp.float32),
        grid=grid,
        in_specs=[
            pl.BlockSpec((TB, H), lambda i: (i, 0)),                            # CLS tile (pipelined)
            pl.BlockSpec((H, H), lambda i: (0, 0), pipeline_mode=resident),     # pooler W (resident)
            pl.BlockSpec((1, H), lambda i: (0, 0), pipeline_mode=resident),     # pooler b (resident)
            pl.BlockSpec((H, n_pad), lambda i: (0, 0), pipeline_mode=resident), # clf W (resident)
            pl.BlockSpec((1, n_pad), lambda i: (0, 0), pipeline_mode=resident), # clf b (resident)
        ],
        out_specs=pl.BlockSpec((TB, n_pad), lambda i: (i, 0)),
        compiler_params=pltpu.CompilerParams(
            dimension_semantics=("parallel",),
            vmem_limit_bytes=_vmem_limit_bytes(TB, H, n_pad, w_itemsize)),
    )(cls_in, params["pw"], params["pb"], params["cw"], params["cb"])

    pred = pred_padded[:, :num_label]
    return cls, pred


if __name__ == "__main__":
    # TODO(synk): the transformer backbone `self.model` is external (HuggingFace);
    # we feed a synthetic last_hidden_state instead of reimplementing it.
    B, S, H, NUM_LABEL = 2, 8, 32, 4

    key = jax.random.PRNGKey(0)
    k1, k2, k3, k4, k5 = jax.random.split(key, 5)

    last_hidden = jax.random.normal(k1, (B, S, H), dtype=jnp.float32)
    pooler_w = jax.random.normal(k2, (H, H), dtype=jnp.float32) * 0.05
    pooler_b = jax.random.normal(k3, (H,), dtype=jnp.float32) * 0.05
    clf_w = jax.random.normal(k4, (NUM_LABEL, H), dtype=jnp.float32) * 0.05
    clf_b = jax.random.normal(k5, (NUM_LABEL,), dtype=jnp.float32) * 0.05

    # One-time weight prep (transpose / pad / cast), then the per-call head.
    params = prepare_head_params(pooler_w, pooler_b, clf_w, clf_b,
                                 compute_dtype=jnp.bfloat16)
    head_fn = jax.jit(functools.partial(custom_model_head, params=params))

    cls_out, pred = head_fn(last_hidden)
    jax.block_until_ready((cls_out, pred))

    # Reference check in plain JAX (same math as the PyTorch head, f32).
    cls_ref = last_hidden[:, 0, :]
    pooled_ref = jnp.tanh(cls_ref @ pooler_w.T + pooler_b)
    pred_ref = pooled_ref @ clf_w.T + clf_b

    assert cls_out.shape == (B, H) and pred.shape == (B, NUM_LABEL)
    assert jnp.allclose(cls_out, cls_ref, atol=1e-6)
    # bf16 compute (f32 accumulation): loosened tolerance vs. the f32 reference.
    assert jnp.allclose(pred, pred_ref, atol=2e-2)

    print("KERNEL_OK")
</pallas_src>

<mosaic_0001>
module attributes {stable_mosaic.version = 11 : i64} {
  func.func @head_kernel(%arg0: i32, %arg1: memref<2x32xbf16, #tpu.memory_space<vmem>>, %arg2: memref<32x32xbf16, #tpu.memory_space<vmem>>, %arg3: memref<1x32xf32, #tpu.memory_space<vmem>>, %arg4: memref<32x128xbf16, #tpu.memory_space<vmem>>, %arg5: memref<1x128xf32, #tpu.memory_space<vmem>>, %arg6: memref<2x128xf32, #tpu.memory_space<vmem>>) attributes {dimension_semantics = [#tpu.dimension_semantics<parallel>], iteration_bounds = array<i64: 1>, scalar_prefetch = 0 : i64, scratch_operands = 0 : i64, tpu.core_type = #tpu.core_type<tc>, window_params = [{transform_indices = @transform_0, window_bounds = array<i64: 2, 32>}, {pipeline_mode = #tpu.pipeline_mode<synchronous>, transform_indices = @transform_1, window_bounds = array<i64: 32, 32>}, {pipeline_mode = #tpu.pipeline_mode<synchronous>, transform_indices = @transform_2, window_bounds = array<i64: 1, 32>}, {pipeline_mode = #tpu.pipeline_mode<synchronous>, transform_indices = @transform_3, window_bounds = array<i64: 32, 128>}, {pipeline_mode = #tpu.pipeline_mode<synchronous>, transform_indices = @transform_4, window_bounds = array<i64: 1, 128>}, {transform_indices = @transform_5, window_bounds = array<i64: 2, 128>}]} {
    %c0 = arith.constant 0 : index
    %c0_0 = arith.constant 0 : index
    %0 = vector.load %arg1[%c0, %c0_0] : memref<2x32xbf16, #tpu.memory_space<vmem>>, vector<2x32xbf16>
    %c0_1 = arith.constant 0 : index
    %c0_2 = arith.constant 0 : index
    %1 = vector.load %arg2[%c0_1, %c0_2] : memref<32x32xbf16, #tpu.memory_space<vmem>>, vector<32x32xbf16>
    %cst = arith.constant dense<0.000000e+00> : vector<2x32xf32>
    %2 = tpu.matmul %0, %1, %cst {dimension_numbers = #tpu.dot_dimension_numbers<[1], [0], [0], [1], [0, 0, 1, 1], [], []>} : vector<2x32xbf16>, vector<32x32xbf16>, vector<2x32xf32> -> vector<2x32xf32>
    %c0_3 = arith.constant 0 : index
    %c0_4 = arith.constant 0 : index
    %3 = vector.load %arg3[%c0_3, %c0_4] : memref<1x32xf32, #tpu.memory_space<vmem>>, vector<1x32xf32>
    %4 = vector.broadcast %3 : vector<1x32xf32> to vector<2x32xf32>
    %5 = arith.addf %2, %4 : vector<2x32xf32>
    %6 = math.tanh %5 : vector<2x32xf32>
    %7 = arith.truncf %6 : vector<2x32xf32> to vector<2x32xbf16>
    %c0_5 = arith.constant 0 : index
    %c0_6 = arith.constant 0 : index
    %8 = vector.load %arg4[%c0_5, %c0_6] : memref<32x128xbf16, #tpu.memory_space<vmem>>, vector<32x128xbf16>
    %cst_7 = arith.constant dense<0.000000e+00> : vector<2x128xf32>
    %9 = tpu.matmul %7, %8, %cst_7 {dimension_numbers = #tpu.dot_dimension_numbers<[1], [0], [0], [1], [0, 0, 1, 1], [], []>} : vector<2x32xbf16>, vector<32x128xbf16>, vector<2x128xf32> -> vector<2x128xf32>
    %c0_8 = arith.constant 0 : index
    %c0_9 = arith.constant 0 : index
    %10 = vector.load %arg5[%c0_8, %c0_9] : memref<1x128xf32, #tpu.memory_space<vmem>>, vector<1x128xf32>
    %11 = vector.broadcast %10 : vector<1x128xf32> to vector<2x128xf32>
    %12 = arith.addf %9, %11 : vector<2x128xf32>
    %c0_10 = arith.constant 0 : index
    %c0_11 = arith.constant 0 : index
    %13 = vector.load %arg6[%c0_10, %c0_11] : memref<2x128xf32, #tpu.memory_space<vmem>>, vector<2x128xf32>
    tpu.vector_store %arg6[%c0_10, %c0_11], %12 {strides = array<i32>} : memref<2x128xf32, #tpu.memory_space<vmem>>, vector<2x128xf32>,
    return
  }
  func.func @transform_0(%arg0: i32) -> (i32, i32) {
    %c0_i32 = arith.constant 0 : i32
    %c0_i32_0 = arith.constant 0 : i32
    return %arg0, %c0_i32 : i32, i32
  }
  func.func @transform_1(%arg0: i32) -> (i32, i32) {
    %c0_i32 = arith.constant 0 : i32
    %c0_i32_0 = arith.constant 0 : i32
    %c0_i32_1 = arith.constant 0 : i32
    return %c0_i32, %c0_i32_0 : i32, i32
  }
  func.func @transform_2(%arg0: i32) -> (i32, i32) {
    %c0_i32 = arith.constant 0 : i32
    %c0_i32_0 = arith.constant 0 : i32
    %c0_i32_1 = arith.constant 0 : i32
    return %c0_i32, %c0_i32_0 : i32, i32
  }
  func.func @transform_3(%arg0: i32) -> (i32, i32) {
    %c0_i32 = arith.constant 0 : i32
    %c0_i32_0 = arith.constant 0 : i32
    %c0_i32_1 = arith.constant 0 : i32
    return %c0_i32, %c0_i32_0 : i32, i32
  }
  func.func @transform_4(%arg0: i32) -> (i32, i32) {
    %c0_i32 = arith.constant 0 : i32
    %c0_i32_0 = arith.constant 0 : i32
    %c0_i32_1 = arith.constant 0 : i32
    return %c0_i32, %c0_i32_0 : i32, i32
  }
  func.func @transform_5(%arg0: i32) -> (i32, i32) {
    %c0_i32 = arith.constant 0 : i32
    %c0_i32_0 = arith.constant 0 : i32
    return %arg0, %c0_i32 : i32, i32
  }
}

</mosaic_0001>

<llo_original>
// kernel: custom_model_head.1
$region0: #{custom_model_head.1}
  #allocation0 [shape = 'u32[]', space=smem, size = 0x4, offset = 0x4, fixed_abs, tag = 'smem constant byte address 0x4 - core index']
  #allocation1 [shape = 'u32[72,128]{1,0:T(1,128)}', space=vmem, size = 0x9000, scoped, tag = 'internal scratch']
  %s0 = inlined_call_operand.vmem [shape: bf16[2,32], index: 0, kind: input, shape index: {}]
  %s1 = inlined_call_operand.hbm [shape: bf16[32,32], index: 1, kind: input, shape index: {}]
  %s2 = inlined_call_operand.vmem [shape: f32[1,32], index: 2, kind: input, shape index: {}]
  %s3 = inlined_call_operand.hbm [shape: bf16[32,128], index: 3, kind: input, shape index: {}]
  %s4 = inlined_call_operand.vmem [shape: f32[1,128], index: 4, kind: input, shape index: {}]
  %s5 = inlined_call_operand.hbm [shape: f32[2,128], index: 5, kind: output, shape index: {}]
  %s6 = sld [smem:[#allocation0]]
  $region38: #{custom_model_head.1} parent=0
    _
  %s8 = ssub.s32 1, %s6
  %s9 = scalar_select 0, %s8, %s6
  $region1: #{custom_model_head.1} parent=0
    #allocation2 [shape = 'u8[8192]{0}', space=vmem, size = 0x2000, scoped, tag = 'input window, operand 1, single buffered']
    #allocation3 [shape = 's32[1]{0}', space=sflag, size = 0x4, scoped, tag = 'scoped memory for custom_model_head.1']
    #allocation4 [shape = 's32[1]{0}', space=sflag, size = 0x4, scoped, tag = 'scoped memory for custom_model_head.1']
    #allocation5 [shape = 'u8[8192]{0}', space=vmem, size = 0x2000, scoped, tag = 'input window, operand 3, single buffered']
    #allocation6 [shape = 's32[1]{0}', space=sflag, size = 0x4, scoped, tag = 'scoped memory for custom_model_head.1']
    #allocation7 [shape = 'u8[1024]{0}', space=vmem, size = 0x400, scoped, tag = 'output window, operand 0, single buffered']
    %10 = vsyncpa [#allocation3], 0
    %11 = vsyncpa [#allocation6], 0
    %12 = vsyncpa [#allocation4], 0
    // Predicated region
    $region2: #{custom_model_head.1} parent=1 // pred_check
      _
    $region3: #{custom_model_head.1} parent=1 // pred_check_branch
      %14 = sbr.rel (0) target = $region5
    $region4: #{custom_model_head.1} parent=1 // pred_region
      _
    $region5: #{custom_model_head.1} parent=1 // pred_fallthru
      _
    // Predicated region
    $region6: #{custom_model_head.1} parent=1 // pred_check
      _
    $region7: #{custom_model_head.1} parent=1 // pred_check_branch
      %16 = sbr.rel (0) target = $region9
    $region8: #{custom_model_head.1} parent=1 // pred_region
      %18 = vsyncadd [#allocation3], 0
      %s19 = sshll.u32 %s1, 4
      %s20 = int_to_ptr.hbm [resolvable:$true] %s19
      %s21 = sshll.u32 [#allocation2], 4
      %s22 = int_to_ptr.vmem [resolvable:$true] %s21
      %27 = dma.hbm_to_vmem [thread:$0]  %s20, 256, %s22, [#allocation3], 64, 64, 4
    $region9: #{custom_model_head.1} parent=1 // pred_fallthru
      _
    // Predicated region
    $region10: #{custom_model_head.1} parent=1 // pred_check
      _
    $region11: #{custom_model_head.1} parent=1 // pred_check_branch
      %29 = sbr.rel (0) target = $region13
    $region12: #{custom_model_head.1} parent=1 // pred_region
      _
    $region13: #{custom_model_head.1} parent=1 // pred_fallthru
      _
    // Predicated region
    $region14: #{custom_model_head.1} parent=1 // pred_check
      _
    $region15: #{custom_model_head.1} parent=1 // pred_check_branch
      %31 = sbr.rel (0) target = $region17
    $region16: #{custom_model_head.1} parent=1 // pred_region
      %33 = vsyncadd [#allocation6], 0
      %s34 = sshll.u32 %s3, 4
      %s35 = int_to_ptr.hbm [resolvable:$true] %s34
      %s36 = sshll.u32 [#allocation5], 4
      %s37 = int_to_ptr.vmem [resolvable:$true] %s36
      %42 = dma.hbm_to_vmem [thread:$0]  %s35, 256, %s37, [#allocation6], 64, 64, 4
    $region17: #{custom_model_head.1} parent=1 // pred_fallthru
      _
    // Predicated region
    $region18: #{custom_model_head.1} parent=1 // pred_check
      _
    $region19: #{custom_model_head.1} parent=1 // pred_check_branch
      %44 = sbr.rel (0) target = $region21
    $region20: #{custom_model_head.1} parent=1 // pred_region
      _
    $region21: #{custom_model_head.1} parent=1 // pred_fallthru
      _
    // Predicated region
    $region22: #{custom_model_head.1} parent=1 // pred_check
      _
    $region23: #{custom_model_head.1} parent=1 // pred_check_branch
      %46 = sbr.rel (0) target = $region25
    $region24: #{custom_model_head.1} parent=1 // pred_region
      %48 = dma.done [#allocation3], 256
    $region25: #{custom_model_head.1} parent=1 // pred_fallthru
      _
    // Predicated region
    $region26: #{custom_model_head.1} parent=1 // pred_check
      _
    $region27: #{custom_model_head.1} parent=1 // pred_check_branch
      %50 = sbr.rel (0) target = $region29
    $region28: #{custom_model_head.1} parent=1 // pred_region
      %52 = dma.done [#allocation6], 256
    $region29: #{custom_model_head.1} parent=1 // pred_fallthru
      _
    %v54 = vld [vmem:[%s0] sm:$0x1]
    %v55 = vld [vmem:[#allocation2] sm:$0xf]
    %v56 = vld [vmem:[#allocation2 + $0x4] sm:$0xf]
    %v57 = vld [vmem:[#allocation2 + $0x8] sm:$0xf]
    %v58 = vld [vmem:[#allocation2 + $0xc] sm:$0xf]
    %v59 = vld [vmem:[%s2] sm:$0x1]
    %v61 = vperm.slane %v59, 0
    %v67 = vunpack.c.l.b16 %v55
    %v68 = vunpack.c.l.b16 %v56
    %v69 = vunpack.c.l.b16 %v57
    %v70 = vunpack.c.l.b16 %v58
    %v71 = vpack.c.b16 %v68, %v67
    %v72 = vpack.c.b16 %v70, %v69
    %vm75 = vcmask 261120
    %v77 = vsel %vm75, %v54, 0
    %79 = vmatpush.bf16.msra.mxu0 0
    %80 = vmatpush.bf16.msra.mxu0 0
    %81 = vmatpush.bf16.msra.mxu0 0
    %82 = vmatpush.bf16.msra.mxu0 0
    %83 = vmatpush.bf16.msra.mxu0 0
    %84 = vmatpush.bf16.msra.mxu0 0
    %85 = vmatpush.bf16.msra.mxu0 %v72
    %86 = vmatpush.bf16.msra.mxu0 %v71
    %87 = vmatmul.bf16.gmra.mxu0 %v77
    %v88 = vpop.f32.mrf.mxu0
    %v89 = vadd.f32 %v61, %v88
    %v90 = vpop.f32.mrf.mxu0
    %91 = vdwg.mxu0
    %v92 = vtanh.pop %v89
    %v93 = vpack.c.bf16 %v92, %v92
    %v94 = vld [vmem:[#allocation5] sm:$0xf]
    %v95 = vld [vmem:[#allocation5 + $0x4] sm:$0xf]
    %v96 = vld [vmem:[#allocation5 + $0x8] sm:$0xf]
    %v97 = vld [vmem:[#allocation5 + $0xc] sm:$0xf]
    %v98 = vld [vmem:[%s4] sm:$0x1]
    %v100 = vperm.slane %v98, 0
    %v106 = vunpack.c.l.b16 %v94
    %v107 = vunpack.c.l.b16 %v95
    %v108 = vunpack.c.l.b16 %v96
    %v109 = vunpack.c.l.b16 %v97
    %v110 = vpack.c.b16 %v107, %v106
    %v111 = vpack.c.b16 %v109, %v108
    %v115 = vsel %vm75, %v93, 0
    %117 = vmatpush.bf16.msra.mxu0 0
    %118 = vmatpush.bf16.msra.mxu0 0
    %119 = vmatpush.bf16.msra.mxu0 0
    %120 = vmatpush.bf16.msra.mxu0 0
    %121 = vmatpush.bf16.msra.mxu0 0
    %122 = vmatpush.bf16.msra.mxu0 0
    %123 = vmatpush.bf16.msra.mxu0 %v111
    %124 = vmatpush.bf16.msra.mxu0 %v110
    %125 = vmatmul.bf16.gmra.mxu0 %v115
    %v126 = vpop.f32.mrf.mxu0
    %v127 = vadd.f32 %v100, %v126
    %v128 = vpop.f32.mrf.mxu0
    %129 = vdwg.mxu0
    %130 = vst [vmem:[#allocation7] sm:$0x3] %v127
    // Predicated region
    $region30: #{custom_model_head.1} parent=1 // pred_check
      _
    $region31: #{custom_model_head.1} parent=1 // pred_check_branch
      %132 = sbr.rel (0) target = $region33
    $region32: #{custom_model_head.1} parent=1 // pred_region
      %134 = vsyncadd [#allocation4], 0
      %s136 = sshll.u32 [#allocation7], 4
      %s137 = int_to_ptr.vmem [resolvable:$true] %s136
      %s138 = sshll.u32 %s5, 4
      %s139 = int_to_ptr.hbm [resolvable:$true] %s138
      %141 = dma.vmem_to_hbm [thread:$0]  %s137, 32, %s139, [#allocation4]
    $region33: #{custom_model_head.1} parent=1 // pred_fallthru
      _
    // Predicated region
    $region34: #{custom_model_head.1} parent=1 // pred_check
      _
    $region35: #{custom_model_head.1} parent=1 // pred_check_branch
      %143 = sbr.rel (0) target = $region37
    $region36: #{custom_model_head.1} parent=1 // pred_region
      %145 = dma.done [#allocation4], 32
    $region37: #{custom_model_head.1} parent=1 // pred_fallthru
      _
    %146 = vsyncpa [#allocation3], 1
    %147 = vsyncpa [#allocation6], 1
    %148 = vsyncpa [#allocation4], 1

</llo_original>
